<compile_context>
chip_gen: v7x
topology: tpu7x:2x2x1
jax: 0.10.0
libtpu: 0.0.40
codegen_flags: <defaults>
</compile_context>

<pallas_src>
import functools

import jax
import jax.numpy as jnp
from jax.experimental import pallas as pl
from jax.experimental.pallas import tpu as pltpu

_CHUNK_ELEMS = 32 * 1024          # ~128 KiB of f32 per in-kernel row sub-chunk
_DEFAULT_BLOCK_BYTES = 8 << 20    # target HBM bytes per input block (per pipeline buffer)


def _cdiv(a, b):
    return -(-a // b)


def _round_up(x, m):
    return _cdiv(x, m) * m


def _sublane_mult(dtype):
    # f32 -> 8, bf16 -> 16, int8 -> 32 (packed sublane multiple).
    return max(8, 32 // jnp.dtype(dtype).itemsize)


def _focal_elementwise(x, t, *, gamma, pos_weight, binary_fast):
    """Per-element focal loss on float32 x/t.

    Mirrors torch: bce = BCEWithLogits(x, t, pos_weight); (1 - exp(-bce))**gamma * bce.
    """
    e = jnp.exp(-jnp.abs(x))                        # EUP #1
    sp = jnp.maximum(-x, 0.0) + jnp.log1p(e)        # softplus(-x); EUP #2
    if pos_weight is None:
        bce = (1.0 - t) * x + sp
    else:
        pw = jnp.float32(pos_weight)
        bce = (1.0 - t) * x + (pw * t + (1.0 - t)) * sp

    if binary_fast:
        # For t in {0, 1} (and pos_weight None): 1 - exp(-bce) has a closed form reusing
        # e = exp(-|x|), replacing the third exp with one exact divide (cheaper on EUP).
        match = (x >= 0.0) == (t >= 0.5)
        om = jnp.where(match, e, 1.0) / (1.0 + e)   # == 1 - pt
    else:
        om = 1.0 - jnp.exp(-bce)                    # general (soft) targets / pos_weight

    g = float(gamma)
    if g == round(g) and 0 <= int(round(g)) <= 8:
        gi = int(round(g))
        if gi == 0:
            mod = jnp.ones_like(om)
        else:
            mod = om
            for _ in range(gi - 1):                 # integer gamma: repeated multiply
                mod = mod * om
    else:
        mod = jnp.power(om, jnp.float32(g))
    return mod * bce


def _focal_sum_kernel(logits_ref, targets_ref, partial_ref, *,
                      gamma, pos_weight, binary_fast, valid_m,
                      row_tile, chunk, n_chunks, need_row_mask, unroll):
    i = pl.program_id(1)

    @pl.when(i == 0)
    def _():
        partial_ref[...] = jnp.zeros_like(partial_ref)

    n_cols = logits_ref.shape[1]
    # Nominal (unclamped) first row of this block in the full array; only used for the
    # validity mask, so clamped (over-coverage) blocks contribute exactly 0.
    block_row0 = (pl.program_id(0) * pl.num_programs(1) + i) * row_tile

    def chunk_body(c, carry):
        r0 = pl.multiple_of(c * chunk, chunk)
        x = logits_ref[pl.ds(r0, chunk), :].astype(jnp.float32)
        t = targets_ref[pl.ds(r0, chunk), :].astype(jnp.float32)
        focal = _focal_elementwise(x, t, gamma=gamma, pos_weight=pos_weight,
                                   binary_fast=binary_fast)
        if need_row_mask:
            # Low-rank (chunk, 1) mask; broadcast inside the select. Must stay ahead of
            # the accumulate: the ragged tail of a partial block is stale VMEM data.
            rows = block_row0 + r0 + jax.lax.broadcasted_iota(jnp.int32, (chunk, 1), 0)
            focal = jnp.where(rows < valid_m, focal, 0.0)
        # Fold the chunk into the resident (8, n_cols) accumulator with VPU adds only.
        partial_ref[...] += focal.reshape(chunk // 8, 8, n_cols).sum(axis=0)
        return carry

    jax.lax.fori_loop(0, n_chunks, chunk_body, 0, unroll=unroll)


def _focal_map_kernel(logits_ref, targets_ref, out_ref, *,
                      gamma, alpha, pos_weight, binary_fast):
    x = logits_ref[...].astype(jnp.float32)
    t = targets_ref[...].astype(jnp.float32)
    focal = _focal_elementwise(x, t, gamma=gamma, pos_weight=pos_weight,
                               binary_fast=binary_fast)
    if alpha is not None:
        focal = jnp.float32(alpha) * focal
    out_ref[...] = focal.astype(out_ref.dtype)


def focal_loss(logits, targets, *, gamma=2.0, alpha=None, reduction='mean',
               pos_weight=None, binary_targets=True,
               block_bytes=_DEFAULT_BLOCK_BYTES):
    """Pallas TPU FocalLoss(gamma, alpha, reduction, pos_weight).forward(logits, targets).

    alpha (scalar) is applied as a uniform scale, exactly as in the reference module.
    Set binary_targets=False if targets are soft labels (not exactly 0/1).
    """
    # TODO(synk): per-class (tensor) pos_weight is not supported; scalar pos_weight only.
    assert logits.shape == targets.shape and logits.ndim >= 1
    assert reduction in ('mean', 'sum', 'none')

    if targets.dtype == jnp.bool_:
        targets = targets.astype(jnp.int8)

    orig_shape = logits.shape
    if logits.ndim != 2:
        logits = logits.reshape(-1, orig_shape[-1])
        targets = targets.reshape(-1, orig_shape[-1])

    M, N = logits.shape
    lane_n = _round_up(N, 128)
    row_align = max(_sublane_mult(logits.dtype), _sublane_mult(targets.dtype))
    binary_fast = bool(binary_targets) and (pos_weight is None)

    # Per-generation VMEM budget (v5e/v6e: 128 MiB physical, v7x: 64 MiB).
    try:
        vmem_cap = int(pltpu.get_tpu_info().vmem_capacity_bytes)
    except Exception:
        vmem_cap = 64 << 20
    vmem_limit = min(vmem_cap // 2, 64 << 20)       # 64 MiB (v5e/v6e) / 32 MiB (v7x)

    if reduction == 'none':
        # Elementwise map kernel: (rt, N) in -> (rt, N) out, partial blocks clamp writes.
        rt = max(row_align,
                 min(_round_up(M, row_align),
                     ((1 << 20) // (lane_n * 4)) // row_align * row_align))
        out_dtype = logits.dtype if jnp.issubdtype(logits.dtype, jnp.floating) else jnp.float32
        kernel = functools.partial(_focal_map_kernel, gamma=float(gamma), alpha=alpha,
                                   pos_weight=pos_weight, binary_fast=binary_fast)
        out = pl.pallas_call(
            kernel,
            out_shape=jax.ShapeDtypeStruct((M, N), out_dtype),
            grid_spec=pltpu.PrefetchScalarGridSpec(
                num_scalar_prefetch=0,
                grid=(_cdiv(M, rt),),
                in_specs=[pl.BlockSpec((rt, N), lambda i: (i, 0)),
                          pl.BlockSpec((rt, N), lambda i: (i, 0))],
                out_specs=pl.BlockSpec((rt, N), lambda i: (i, 0))),
            compiler_params=pltpu.CompilerParams(
                dimension_semantics=("parallel",),
                vmem_limit_bytes=vmem_limit),
        )(logits, targets)
        return out.reshape(orig_shape)

    # ----- mean / sum path: fold into a tiny (n_par*8, N) partial-sum output -----
    n_par = 2 if M >= 2 * row_align else 1          # split the batch across TCs (v7x)
    rows_per_core = _cdiv(M, n_par)

    # Rows per inner fori_loop step (caps live temporaries / vregs regardless of block).
    chunk = max(row_align, (_CHUNK_ELEMS // lane_n) // row_align * row_align)
    chunk = min(chunk, 256, _round_up(rows_per_core, row_align))

    # Row tile: as large as the block-byte target and the per-generation VMEM budget
    # allow (2 inputs x 2 pipeline buffers), no artificial row cap.
    bytes_per_row = lane_n * (logits.dtype.itemsize + targets.dtype.itemsize)
    input_budget = (vmem_limit * 3) // 4
    row_cap = min(input_budget // (2 * bytes_per_row),
                  max(1, block_bytes // (lane_n * logits.dtype.itemsize)))
    row_cap = max(chunk, row_cap // chunk * chunk)

    n_inner = _cdiv(rows_per_core, row_cap)
    row_tile = min(row_cap, _round_up(_cdiv(rows_per_core, n_inner), chunk))
    n_chunks = row_tile // chunk

    n_blocks = _cdiv(M, row_tile)                   # blocks that overlap real rows
    last_block = n_blocks - 1
    need_row_mask = (n_par * n_inner * row_tile) != M

    kernel = functools.partial(
        _focal_sum_kernel,
        gamma=float(gamma), pos_weight=pos_weight, binary_fast=binary_fast,
        valid_m=M, row_tile=row_tile, chunk=chunk, n_chunks=n_chunks,
        need_row_mask=need_row_mask, unroll=bool(n_chunks <= 8))

    def in_map(p, i):
        # Clamp so any over-coverage block (n_par * n_inner rounding) re-reads valid
        # memory; its rows are fully masked to zero by the in-kernel row mask anyway.
        return (jnp.minimum(p * n_inner + i, last_block), 0)

    partials = pl.pallas_call(
        kernel,
        out_shape=jax.ShapeDtypeStruct((n_par * 8, N), jnp.float32),
        grid_spec=pltpu.PrefetchScalarGridSpec(
            num_scalar_prefetch=0,
            grid=(n_par, n_inner),
            in_specs=[pl.BlockSpec((row_tile, N), in_map),
                      pl.BlockSpec((row_tile, N), in_map)],
            out_specs=pl.BlockSpec((8, N), lambda p, i: (p, 0))),
        compiler_params=pltpu.CompilerParams(
            dimension_semantics=("parallel", "arbitrary"),
            vmem_limit_bytes=vmem_limit),
    )(logits, targets)

    total = jnp.sum(partials)
    scale = 1.0 / float(M * N) if reduction == 'mean' else 1.0
    if alpha is not None:
        scale = scale * float(alpha)
    return total * jnp.float32(scale)


def _focal_loss_ref(logits, targets, gamma=2.0, alpha=None, reduction='mean',
                    pos_weight=None):
    """Pure-JAX mirror of the PyTorch FocalLoss forward (computed in float32)."""
    x = logits.astype(jnp.float32)
    t = targets.astype(jnp.float32)
    sp = jnp.maximum(-x, 0.0) + jnp.log1p(jnp.exp(-jnp.abs(x)))
    if pos_weight is None:
        bce = (1.0 - t) * x + sp
    else:
        bce = (1.0 - t) * x + (pos_weight * t + (1.0 - t)) * sp
    pt = jnp.exp(-bce)
    focal = (1.0 - pt) ** gamma * bce
    if alpha is not None:
        focal = alpha * focal
    if reduction == 'mean':
        return focal.mean()
    if reduction == 'sum':
        return focal.sum()
    return focal


if __name__ == "__main__":
    key = jax.random.PRNGKey(0)
    ks = jax.random.split(key, 8)

    # (a) Lane-aligned binary multilabel batch: batch=16, num_labels=128.
    logits = jax.random.normal(ks[0], (16, 128), jnp.float32) * 2.0
    targets = jax.random.bernoulli(ks[1], 0.3, (16, 128)).astype(jnp.float32)
    loss = jax.block_until_ready(focal_loss(logits, targets, gamma=2.0))
    ref = _focal_loss_ref(logits, targets, gamma=2.0)
    assert jnp.allclose(loss, ref, rtol=1e-4, atol=1e-6), (loss, ref)

    # (b) Ragged shape: no wrapper padding, in-kernel row mask over the partial block.
    logits2 = jax.random.normal(ks[2], (10, 37), jnp.float32) * 2.0
    targets2 = jax.random.bernoulli(ks[3], 0.3, (10, 37)).astype(jnp.float32)
    loss2 = jax.block_until_ready(focal_loss(logits2, targets2, gamma=2.0))
    ref2 = _focal_loss_ref(logits2, targets2, gamma=2.0)
    assert jnp.allclose(loss2, ref2, rtol=1e-4, atol=1e-6), (loss2, ref2)

    # (c) Narrow (bf16) inputs + 'sum' reduction.
    logits3 = (jax.random.normal(ks[4], (24, 64), jnp.float32) * 2.0).astype(jnp.bfloat16)
    targets3 = jax.random.bernoulli(ks[5], 0.3, (24, 64)).astype(jnp.bfloat16)
    loss3 = jax.block_until_ready(focal_loss(logits3, targets3, reduction='sum'))
    ref3 = _focal_loss_ref(logits3, targets3, reduction='sum')
    assert jnp.allclose(loss3, ref3, rtol=1e-3, atol=1e-3), (loss3, ref3)

    # (d) Soft targets + scalar pos_weight + alpha, reduction='none' (general path).
    logits4 = jax.random.normal(ks[6], (8, 32), jnp.float32)
    targets4 = jax.random.uniform(ks[7], (8, 32), jnp.float32)
    out4 = jax.block_until_ready(
        focal_loss(logits4, targets4, gamma=2.0, alpha=0.25, reduction='none',
                   pos_weight=1.5, binary_targets=False))
    ref4 = _focal_loss_ref(logits4, targets4, gamma=2.0, alpha=0.25,
                           reduction='none', pos_weight=1.5)
    assert out4.shape == (8, 32)
    assert jnp.allclose(out4, ref4, rtol=1e-4, atol=1e-6), (out4, ref4)

    print("KERNEL_OK")
</pallas_src>

<mosaic_0001>
module attributes {stable_mosaic.version = 11 : i64} {
  func.func @_focal_sum_kernel(%arg0: i32, %arg1: i32, %arg2: memref<8x128xf32, #tpu.memory_space<vmem>>, %arg3: memref<8x128xf32, #tpu.memory_space<vmem>>, %arg4: memref<8x128xf32, #tpu.memory_space<vmem>>) attributes {dimension_semantics = [#tpu.dimension_semantics<parallel>, #tpu.dimension_semantics<arbitrary>], iteration_bounds = array<i64: 2, 1>, scalar_prefetch = 0 : i64, scratch_operands = 0 : i64, tpu.core_type = #tpu.core_type<tc>, window_params = [{transform_indices = @transform_0, window_bounds = array<i64: 8, 128>}, {transform_indices = @transform_1, window_bounds = array<i64: 8, 128>}, {transform_indices = @transform_2, window_bounds = array<i64: 8, 128>}]} {
    %c0_i32 = arith.constant 0 : i32
    %0 = arith.cmpi eq, %arg1, %c0_i32 : i32
    %1 = arith.extui %0 : i1 to i32
    %c0_i32_0 = arith.constant 0 : i32
    %2 = arith.cmpi ne, %1, %c0_i32_0 : i32
    scf.if %2 {
      %cst_16 = arith.constant 0.000000e+00 : f32
      %41 = vector.broadcast %cst_16 : f32 to vector<8x128xf32>
      %c0_17 = arith.constant 0 : index
      %c0_18 = arith.constant 0 : index
      %42 = vector.load %arg4[%c0_17, %c0_18] : memref<8x128xf32, #tpu.memory_space<vmem>>, vector<8x128xf32>
      tpu.vector_store %arg4[%c0_17, %c0_18], %41 {strides = array<i32>} : memref<8x128xf32, #tpu.memory_space<vmem>>, vector<8x128xf32>,
    } else {
    }
    %c0_i32_1 = arith.constant 0 : i32
    %c8_i32 = arith.constant 8 : i32
    %3 = arith.muli %c0_i32_1, %c8_i32 : i32
    %4 = tpu.assume_multiple %3, 8 : i32
    %5 = arith.index_cast %4 : i32 to index
    %c0 = arith.constant 0 : index
    %6 = vector.load %arg2[%5, %c0] : memref<8x128xf32, #tpu.memory_space<vmem>>, vector<8x128xf32>
    %7 = arith.index_cast %4 : i32 to index
    %c0_2 = arith.constant 0 : index
    %8 = vector.load %arg3[%7, %c0_2] : memref<8x128xf32, #tpu.memory_space<vmem>>, vector<8x128xf32>
    %9 = math.absf %6 : vector<8x128xf32>
    %cst = arith.constant 0.000000e+00 : f32
    %10 = vector.broadcast %cst : f32 to vector<8x128xf32>
    %11 = arith.subf %10, %9 : vector<8x128xf32>
    %12 = math.exp %11 : vector<8x128xf32>
    %cst_3 = arith.constant 0.000000e+00 : f32
    %13 = vector.broadcast %cst_3 : f32 to vector<8x128xf32>
    %14 = arith.subf %13, %6 : vector<8x128xf32>
    %cst_4 = arith.constant 0.000000e+00 : f32
    %15 = vector.broadcast %cst_4 : f32 to vector<8x128xf32>
    %16 = arith.maximumf %14, %15 : vector<8x128xf32>
    %17 = math.log1p %12 : vector<8x128xf32>
    %18 = arith.addf %16, %17 : vector<8x128xf32>
    %cst_5 = arith.constant 1.000000e+00 : f32
    %19 = vector.broadcast %cst_5 : f32 to vector<8x128xf32>
    %20 = arith.subf %19, %8 : vector<8x128xf32>
    %21 = arith.mulf %20, %6 : vector<8x128xf32>
    %22 = arith.addf %21, %18 : vector<8x128xf32>
    %cst_6 = arith.constant 0.000000e+00 : f32
    %23 = vector.broadcast %cst_6 : f32 to vector<8x128xf32>
    %24 = arith.cmpf oge, %6, %23 : vector<8x128xf32>
    %cst_7 = arith.constant 5.000000e-01 : f32
    %25 = vector.broadcast %cst_7 : f32 to vector<8x128xf32>
    %26 = arith.cmpf oge, %8, %25 : vector<8x128xf32>
    %27 = arith.xori %24, %26 : vector<8x128xi1>
    %cst_8 = arith.constant dense<true> : vector<8x128xi1>
    %28 = arith.xori %27, %cst_8 : vector<8x128xi1>
    %cst_9 = arith.constant 1.000000e+00 : f32
    %29 = vector.broadcast %cst_9 : f32 to vector<8x128xf32>
    %30 = arith.select %28, %12, %29 : vector<8x128xi1>, vector<8x128xf32>
    %cst_10 = arith.constant 1.000000e+00 : f32
    %31 = vector.broadcast %cst_10 : f32 to vector<8x128xf32>
    %32 = arith.addf %31, %12 : vector<8x128xf32>
    %33 = arith.divf %30, %32 : vector<8x128xf32>
    %34 = arith.mulf %33, %33 : vector<8x128xf32>
    %35 = arith.mulf %34, %22 : vector<8x128xf32>
    %c0_11 = arith.constant 0 : index
    %c0_12 = arith.constant 0 : index
    %36 = vector.load %arg4[%c0_11, %c0_12] : memref<8x128xf32, #tpu.memory_space<vmem>>, vector<8x128xf32>
    %37 = vector.shape_cast %35 : vector<8x128xf32> to vector<1x8x128xf32>
    %cst_13 = arith.constant dense<0.000000e+00> : vector<8x128xf32>
    %38 = vector.multi_reduction <add>, %37, %cst_13 [0] : vector<1x8x128xf32> to vector<8x128xf32>
    %39 = arith.addf %36, %38 : vector<8x128xf32>
    %c0_14 = arith.constant 0 : index
    %c0_15 = arith.constant 0 : index
    %40 = vector.load %arg4[%c0_14, %c0_15] : memref<8x128xf32, #tpu.memory_space<vmem>>, vector<8x128xf32>
    tpu.vector_store %arg4[%c0_14, %c0_15], %39 {strides = array<i32>} : memref<8x128xf32, #tpu.memory_space<vmem>>, vector<8x128xf32>,
    %c1_i32 = arith.constant 1 : i32
    return
  }
  func.func @transform_0(%arg0: i32, %arg1: i32) -> (i32, i32) {
    %c1_i32 = arith.constant 1 : i32
    %0 = arith.muli %arg0, %c1_i32 : i32
    %1 = arith.addi %0, %arg1 : i32
    %c1_i32_0 = arith.constant 1 : i32
    %2 = arith.minsi %1, %c1_i32_0 : i32
    %c0_i32 = arith.constant 0 : i32
    %c0_i32_1 = arith.constant 0 : i32
    return %2, %c0_i32 : i32, i32
  }
  func.func @transform_1(%arg0: i32, %arg1: i32) -> (i32, i32) {
    %c1_i32 = arith.constant 1 : i32
    %0 = arith.muli %arg0, %c1_i32 : i32
    %1 = arith.addi %0, %arg1 : i32
    %c1_i32_0 = arith.constant 1 : i32
    %2 = arith.minsi %1, %c1_i32_0 : i32
    %c0_i32 = arith.constant 0 : i32
    %c0_i32_1 = arith.constant 0 : i32
    return %2, %c0_i32 : i32, i32
  }
  func.func @transform_2(%arg0: i32, %arg1: i32) -> (i32, i32) {
    %c0_i32 = arith.constant 0 : i32
    %c0_i32_0 = arith.constant 0 : i32
    return %arg0, %c0_i32 : i32, i32
  }
}

</mosaic_0001>

<llo_original>
// kernel: tpu_custom_call.1
$region0: #{tpu_custom_call.1}
  #allocation0 [shape = 'u32[]', space=smem, size = 0x4, offset = 0x4, fixed_abs, tag = 'smem constant byte address 0x4 - core index']
  #allocation1 [shape = 'u32[144,128]{1,0:T(1,128)}', space=vmem, size = 0x12000, scoped, tag = 'internal scratch']
  %s0 = inlined_call_operand.hbm [shape: f32[16,128], index: 0, kind: input, shape index: {}]
  %s1 = inlined_call_operand.hbm [shape: f32[16,128], index: 1, kind: input, shape index: {}]
  %s2 = inlined_call_operand.hbm [shape: f32[16,128], index: 2, kind: output, shape index: {}]
  %s3 = sld [smem:[#allocation0]]
  $region53: #{tpu_custom_call.1} parent=0
    _
  %s5 = ssub.s32 1, %s3
  %s6 = scalar_select 0, %s5, %s3
  $region1: #{tpu_custom_call.1} parent=0
    #allocation2 [shape = 'u8[8192]{0}', space=vmem, size = 0x2000, scoped, tag = 'input window, operand 0']
    #allocation3 [shape = 's32[2]{0}', space=sflag, size = 0x8, scoped, tag = 'scoped memory for tpu_custom_call.1']
    #allocation4 [shape = 's32[2]{0}', space=sflag, size = 0x8, scoped, tag = 'scoped memory for tpu_custom_call.1']
    #allocation5 [shape = 'u8[8192]{0}', space=vmem, size = 0x2000, scoped, tag = 'input window, operand 1']
    #allocation6 [shape = 's32[2]{0}', space=sflag, size = 0x8, scoped, tag = 'scoped memory for tpu_custom_call.1']
    #allocation7 [shape = 'u8[8192]{0}', space=vmem, size = 0x2000, scoped, tag = 'output window, operand 0']
    %7 = vsyncpa [#allocation3], 0
    %s8 = scalar_lea.sflag [#allocation3], 1
    %9 = vsyncpa %s8, 0
    %10 = vsyncpa [#allocation6], 0
    %s11 = scalar_lea.sflag [#allocation6], 1
    %12 = vsyncpa %s11, 0
    %13 = vsyncpa [#allocation4], 0
    %s14 = scalar_lea.sflag [#allocation4], 1
    %15 = vsyncpa %s14, 0
    loop: start=0, step=1, limit=4
    $region2: #{tpu_custom_call.1} parent=1 // loop_pre_header
      _
    $region3: #{tpu_custom_call.1} parent=1 // loop_header
      %s17 = sphi 0, %s21
      %p18 = scmp.ge.s32.totalorder %s17, 4
      %s24 = sphi 0, %s36
      %s25 = sphi 0, %s32
      %s26 = sphi 0, %s24
      %s27 = sphi 0, %s25
      %s28 = sphi 0, %s26
      %s29 = sphi 0, %s27
      %s45 = sphi 0, %s47
      %s48 = sphi 0, %s45
      %s49 = sphi 0, %s48
      %s65 = sphi 0, %s49
      %s77 = sphi 0, %s79
      %s80 = sphi 0, %s77
      %s81 = sphi 0, %s80
      %s97 = sphi 0, %s81
      %s103 = sphi 0, %s105
      %s106 = sphi 0, %s103
      %s107 = sphi 0, %s106
      %s123 = sphi 0, %s107
    $region4: #{tpu_custom_call.1} parent=1 // loop_header_branch
      %20 = sbr.rel (%p18) target = $region8
    $region5: #{tpu_custom_call.1} parent=1 // loop_body
      %s22 = ssub.s32 %s17, 1
      %s23 = ssub.s32 %s17, 2
      %s30 = sadd.s32 1, %s25
      %p31 = scmp.ge.s32.totalorder %s30, 1
      %s32 = scalar_select %p31, 0, %s30
      %s33 = sadd.s32 1, %s24
      %s34 = scalar_select %p31, %s33, %s24
      %p35 = scmp.ge.s32.totalorder %s34, 2
      %s36 = scalar_select %p35, 0, %s34
      %s37 = sadd.s32 %s24, %s25
      %p38 = scmp.lt.s32.totalorder %s37, 1
      %s39 = scalar_select %p38, %s37, 1
      %s40 = sadd.s32 %s36, %s32
      %p41 = scmp.lt.s32.totalorder %s40, 1
      %s42 = scalar_select %p41, %s40, 1
      %s43 = ssub.s32 %s39, %s42
      %p44 = scmp.eq.s32.totalorder %s43, 0
      %s46 = sadd.s32 %s45, 1
      %s47 = scalar_select %p44, %s45, %s46
      %p50 = pneg %p44
      %p51 = scmp.eq.s32.totalorder %s17, 1
      %p52 = por %p50, %p51
      %p53 = scmp.ne.s32.totalorder %s45, %s48
      %p54 = scmp.eq.s32.totalorder %s17, 0
      %p55 = por %p53, %p54
      %p56 = scmp.ne.s32.totalorder %s45, %s48
      %p57 = scmp.eq.s32.totalorder %s22, 1
      %p58 = por %p56, %p57
      %p59 = scmp.ne.s32.totalorder %s48, %s49
      %p60 = scmp.eq.s32.totalorder %s22, 0
      %p61 = por %p59, %p60
      %p62 = scmp.ne.s32.totalorder %s48, %s49
      %p63 = scmp.eq.s32.totalorder %s23, 1
      %p64 = por %p62, %p63
      %p66 = scmp.ne.s32.totalorder %s49, %s65
      %p67 = scmp.eq.s32.totalorder %s23, 0
      %p68 = por %p66, %p67
      %s69 = sadd.s32 %s24, %s25
      %p70 = scmp.lt.s32.totalorder %s69, 1
      %s71 = scalar_select %p70, %s69, 1
      %s72 = sadd.s32 %s36, %s32
      %p73 = scmp.lt.s32.totalorder %s72, 1
      %s74 = scalar_select %p73, %s72, 1
      %s75 = ssub.s32 %s71, %s74
      %p76 = scmp.eq.s32.totalorder %s75, 0
      %s78 = sadd.s32 %s77, 1
      %s79 = scalar_select %p76, %s77, %s78
      %p82 = pneg %p76
      %p83 = scmp.eq.s32.totalorder %s17, 1
      %p84 = por %p82, %p83
      %p85 = scmp.ne.s32.totalorder %s77, %s80
      %p86 = scmp.eq.s32.totalorder %s17, 0
      %p87 = por %p85, %p86
      %p88 = scmp.ne.s32.totalorder %s77, %s80
      %p89 = scmp.eq.s32.totalorder %s22, 1
      %p90 = por %p88, %p89
      %p91 = scmp.ne.s32.totalorder %s80, %s81
      %p92 = scmp.eq.s32.totalorder %s22, 0
      %p93 = por %p91, %p92
      %p94 = scmp.ne.s32.totalorder %s80, %s81
      %p95 = scmp.eq.s32.totalorder %s23, 1
      %p96 = por %p94, %p95
      %p98 = scmp.ne.s32.totalorder %s81, %s97
      %p99 = scmp.eq.s32.totalorder %s23, 0
      %p100 = por %p98, %p99
      %s101 = ssub.s32 %s24, %s36
      %p102 = scmp.eq.s32.totalorder %s101, 0
      %s104 = sadd.s32 %s103, 1
      %s105 = scalar_select %p102, %s103, %s104
      %p108 = pneg %p102
      %p109 = scmp.eq.s32.totalorder %s17, 1
      %p110 = por %p108, %p109
      %p111 = scmp.ne.s32.totalorder %s103, %s106
      %p112 = scmp.eq.s32.totalorder %s17, 0
      %p113 = por %p111, %p112
      %p114 = scmp.ne.s32.totalorder %s103, %s106
      %p115 = scmp.eq.s32.totalorder %s22, 1
      %p116 = por %p114, %p115
      %p117 = scmp.ne.s32.totalorder %s106, %s107
      %p118 = scmp.eq.s32.totalorder %s22, 0
      %p119 = por %p117, %p118
      %p120 = scmp.ne.s32.totalorder %s106, %s107
      %p121 = scmp.eq.s32.totalorder %s23, 1
      %p122 = por %p120, %p121
      %p124 = scmp.ne.s32.totalorder %s107, %s123
      %p125 = scmp.eq.s32.totalorder %s23, 0
      %p126 = por %p124, %p125
      %p127 = scmp.le.s32.totalorder 1, %s17
      %p128 = scmp.lt.s32.totalorder %s17, 3
      %p129 = pnand %p127, %p128
      %p130 = pneg %p129
      // Predicated region
      $region9: #{tpu_custom_call.1} parent=5 // pred_check
        _
      $region10: #{tpu_custom_call.1} parent=5 // pred_check_branch
        %132 = sbr.rel (%p129) target = $region12
      $region11: #{tpu_custom_call.1} parent=5 // pred_region
        %s133 = ssub.s32 %s17, 1
      $region12: #{tpu_custom_call.1} parent=5 // pred_fallthru
        _
      %p134 = scmp.lt.s32.totalorder %s17, 2
      // Predicated region
      $region13: #{tpu_custom_call.1} parent=5 // pred_check
        %p135 = pneg %p134
      $region14: #{tpu_custom_call.1} parent=5 // pred_check_branch
        %137 = sbr.rel (%p135) target = $region16
      $region15: #{tpu_custom_call.1} parent=5 // pred_region
        // Predicated region
        $region17: #{tpu_custom_call.1} parent=15 // pred_check
          %p138 = pneg %p55
        $region18: #{tpu_custom_call.1} parent=15 // pred_check_branch
          %140 = sbr.rel (%p138) target = $region20
        $region19: #{tpu_custom_call.1} parent=15 // pred_region
          %s141 = sand.u32 %s45, 1
          %s142 = scalar_lea.sflag [#allocation3], %s141
          %s143 = sand.u32 %s45, 1
          %s144 = smul.addr %s143, 8
          %s145 = scalar_lea.vmem [#allocation2], %s144
          %s146 = sadd.s32 %s24, %s25
          %p147 = scmp.lt.s32.totalorder %s146, 1
          %s148 = scalar_select %p147, %s146, 1
          %s150 = ssub.s32 128, 128
          %151 = vsyncadd %s142, %s150
          %s152 = smul.addr %s148, 128
          %s153 = scalar_lea.hbm %s0, %s152
          %s155 = sshll.u32 %s145, 4
          %s156 = int_to_ptr.vmem [resolvable:$true] %s155
          %158 = dma.hbm_to_vmem [thread:$0]  %s153, 128, %s156, %s142
        $region20: #{tpu_custom_call.1} parent=15 // pred_fallthru
          _
        // Predicated region
        $region21: #{tpu_custom_call.1} parent=15 // pred_check
          %p159 = pneg %p87
        $region22: #{tpu_custom_call.1} parent=15 // pred_check_branch
          %161 = sbr.rel (%p159) target = $region24
        $region23: #{tpu_custom_call.1} parent=15 // pred_region
          %s162 = sand.u32 %s77, 1
          %s163 = scalar_lea.sflag [#allocation6], %s162
          %s164 = sand.u32 %s77, 1
          %s165 = smul.addr %s164, 8
          %s166 = scalar_lea.vmem [#allocation5], %s165
          %s167 = sadd.s32 %s24, %s25
          %p168 = scmp.lt.s32.totalorder %s167, 1
          %s169 = scalar_select %p168, %s167, 1
          %s171 = ssub.s32 128, 128
          %172 = vsyncadd %s163, %s171
          %s173 = smul.addr %s169, 128
          %s174 = scalar_lea.hbm %s1, %s173
          %s176 = sshll.u32 %s166, 4
          %s177 = int_to_ptr.vmem [resolvable:$true] %s176
          %179 = dma.hbm_to_vmem [thread:$0]  %s174, 128, %s177, %s163
        $region24: #{tpu_custom_call.1} parent=15 // pred_fallthru
          _
      $region16: #{tpu_custom_call.1} parent=5 // pred_fallthru
        _
      %p180 = scmp.le.s32.totalorder 1, %s17
      %p181 = scmp.lt.s32.totalorder %s17, 3
      %p182 = pnand %p180, %p181
      %p183 = pneg %p182
      // Predicated region
      $region25: #{tpu_custom_call.1} parent=5 // pred_check
        _
      $region26: #{tpu_custom_call.1} parent=5 // pred_check_branch
        %185 = sbr.rel (%p182) target = $region28
      $region27: #{tpu_custom_call.1} parent=5 // pred_region
        %s186 = ssub.s32 %s17, 1
        %s187 = sand.u32 %s48, 1
        %s188 = scalar_lea.sflag [#allocation3], %s187
        %s189 = sand.u32 %s48, 1
        %s190 = smul.addr %s189, 8
        %s191 = scalar_lea.vmem [#allocation2], %s190
        // Predicated region
        $region29: #{tpu_custom_call.1} parent=27 // pred_check
          %p192 = pneg %p61
        $region30: #{tpu_custom_call.1} parent=27 // pred_check_branch
          %194 = sbr.rel (%p192) target = $region32
        $region31: #{tpu_custom_call.1} parent=27 // pred_region
          %195 = dma.done %s188, 128
        $region32: #{tpu_custom_call.1} parent=27 // pred_fallthru
          _
        %s196 = sand.u32 %s80, 1
        %s197 = scalar_lea.sflag [#allocation6], %s196
        %s198 = sand.u32 %s80, 1
        %s199 = smul.addr %s198, 8
        %s200 = scalar_lea.vmem [#allocation5], %s199
        // Predicated region
        $region33: #{tpu_custom_call.1} parent=27 // pred_check
          %p201 = pneg %p93
        $region34: #{tpu_custom_call.1} parent=27 // pred_check_branch
          %203 = sbr.rel (%p201) target = $region36
        $region35: #{tpu_custom_call.1} parent=27 // pred_region
          %204 = dma.done %s197, 128
        $region36: #{tpu_custom_call.1} parent=27 // pred_fallthru
          _
        %s205 = sand.u32 %s48, 1
        %s206 = scalar_lea.sflag [#allocation3], %s205
        %s207 = sand.u32 %s48, 1
        %s208 = smul.addr %s207, 8
        %s209 = scalar_lea.vmem [#allocation2], %s208
        %p210 = pneg %p61
        %p211 = pneg %p58
        %s212 = sand.u32 %s80, 1
        %s213 = scalar_lea.sflag [#allocation6], %s212
        %s214 = sand.u32 %s80, 1
        %s215 = smul.addr %s214, 8
        %s216 = scalar_lea.vmem [#allocation5], %s215
        %p217 = pneg %p93
        %p218 = pneg %p90
        %p219 = pneg %p119
        %p220 = pneg %p116
        %s221 = sand.u32 %s106, 1
        %s222 = scalar_lea.sflag [#allocation4], %s221
        %s223 = sand.u32 %s106, 1
        %s224 = smul.addr %s223, 8
        %s225 = scalar_lea.vmem [#allocation7], %s224
        %s226 = sadd.s32 %s26, %s27
        %p227 = scmp.lt.s32.totalorder %s226, 1
        %s228 = scalar_select %p227, %s226, 1
        %s229 = sadd.s32 %s26, %s27
        %p230 = scmp.lt.s32.totalorder %s229, 1
        %s231 = scalar_select %p230, %s229, 1
        %p232 = scmp.eq.s32.totalorder %s27, 0
        // Predicated region
        $region37: #{tpu_custom_call.1} parent=27 // pred_check
          %p233 = pneg %p232
        $region38: #{tpu_custom_call.1} parent=27 // pred_check_branch
          %235 = sbr.rel (%p233) target = $region40
        $region39: #{tpu_custom_call.1} parent=27 // pred_region
          %236 = vst [vmem:[%s225] sm:$0xff] 0.0
        $region40: #{tpu_custom_call.1} parent=27 // pred_fallthru
          _
        %v237 = vld [vmem:[%s191] sm:$0xff]
        %v238 = vld [vmem:[%s200] sm:$0xff]
        %v239 = vand.u32 2147483647, %v237
        %v240 = vsub.f32 0.0, %v239
        %v241 = vmul.f32 %v240, 1.442695
        %v242 = vpow.pop %v241
        %v243 = vsub.f32 0.0, %v237
        %v244 = vmax.f32 %v243, 0.0
        %v245 = vadd.f32 %v242, 1.0
        %v246 = vlog2.pop %v245
        %v247 = vmul.f32 %v246, 0.6931472
        %v248 = vmul.f32 -0.5, %v242
        %v249 = vadd.f32 %v248, 1.0
        %v250 = vmul.f32 %v249, %v242
        %v251 = vand.u32 2147483647, %v242
        %vm252 = vcmp.lt.f32.partialorder %v251, 0.0004427343
        %v253 = vsel %vm252, %v250, %v247
        %v254 = vadd.f32 %v244, %v253
        %v255 = vsub.f32 1.0, %v238
        %v256 = vmul.f32 %v255, %v237
        %v257 = vadd.f32 %v256, %v254
        %vm258 = vcmp.ge.f32.partialorder %v237, 0.0
        %vm259 = vcmp.ge.f32.partialorder %v238, 0.5
        %vm260 = vmxor %vm258, %vm259
        %vm261 = vmxor %vm260, 1
        %v262 = vsel %vm261, %v242, 1.0
        %v263 = vadd.f32 %v242, 1.0
        %v264 = vrcp.pop %v263
        %v265 = vmul.f32 %v262, %v264
        %v266 = vmul.f32 %v265, %v265
        %v267 = vmul.f32 %v266, %v257
        %v268 = vld [vmem:[%s225] sm:$0xff]
        %v269 = vadd.f32 %v267, 0.0
        %v270 = vadd.f32 %v268, %v269
        %271 = vst [vmem:[%s225] sm:$0xff] %v270
        %s272 = sand.u32 %s106, 1
        %s273 = scalar_lea.sflag [#allocation4], %s272
        %s274 = sand.u32 %s106, 1
        %s275 = smul.addr %s274, 8
        %s276 = scalar_lea.vmem [#allocation7], %s275
        // Predicated region
        $region41: #{tpu_custom_call.1} parent=27 // pred_check
          %p277 = pneg %p116
        $region42: #{tpu_custom_call.1} parent=27 // pred_check_branch
          %279 = sbr.rel (%p277) target = $region44
        $region43: #{tpu_custom_call.1} parent=27 // pred_region
          %s281 = ssub.s32 128, 128
          %282 = vsyncadd %s273, %s281
          %s283 = smul.addr %s26, 128
          %s284 = scalar_lea.hbm %s2, %s283
          %s286 = sshll.u32 %s276, 4
          %s287 = int_to_ptr.vmem [resolvable:$true] %s286
          %289 = dma.vmem_to_hbm [thread:$0]  %s287, 128, %s284, %s273
        $region44: #{tpu_custom_call.1} parent=27 // pred_fallthru
          _
      $region28: #{tpu_custom_call.1} parent=5 // pred_fallthru
        _
      %p290 = scmp.le.s32.totalorder 2, %s17
      // Predicated region
      $region45: #{tpu_custom_call.1} parent=5 // pred_check
        %p291 = pneg %p290
      $region46: #{tpu_custom_call.1} parent=5 // pred_check_branch
        %293 = sbr.rel (%p291) target = $region48
      $region47: #{tpu_custom_call.1} parent=5 // pred_region
        %s294 = ssub.s32 %s17, 2
        // Predicated region
        $region49: #{tpu_custom_call.1} parent=47 // pred_check
          %p295 = pneg %p122
        $region50: #{tpu_custom_call.1} parent=47 // pred_check_branch
          %297 = sbr.rel (%p295) target = $region52
        $region51: #{tpu_custom_call.1} parent=47 // pred_region
          %s298 = sand.u32 %s107, 1
          %s299 = scalar_lea.sflag [#allocation4], %s298
          %s300 = sand.u32 %s107, 1
          %s301 = smul.addr %s300, 8
          %s302 = scalar_lea.vmem [#allocation7], %s301
          %303 = dma.done %s299, 128
        $region52: #{tpu_custom_call.1} parent=47 // pred_fallthru
          _
      $region48: #{tpu_custom_call.1} parent=5 // pred_fallthru
        _
    $region6: #{tpu_custom_call.1} parent=1 // loop_footer
      %s21 = sadd.s32 1, %s17
    $region7: #{tpu_custom_call.1} parent=1 // loop_footer_branch
      %16 = sbr.rel target = $region3
    $region8: #{tpu_custom_call.1} parent=1 // loop_exit
      _
    %304 = vsyncpa [#allocation3], 1
    %s305 = scalar_lea.sflag [#allocation3], 1
    %306 = vsyncpa %s305, 1
    %307 = vsyncpa [#allocation6], 1
    %s308 = scalar_lea.sflag [#allocation6], 1
    %309 = vsyncpa %s308, 1
    %310 = vsyncpa [#allocation4], 1
    %s311 = scalar_lea.sflag [#allocation4], 1
    %312 = vsyncpa %s311, 1

</llo_original>
